<compile_context>
chip_gen: v7x
topology: tpu7x:2x2x1
jax: 0.10.0
libtpu: 0.0.40
codegen_flags: <defaults>
</compile_context>

<pallas_src>
import jax
import jax.numpy as jnp
from jax.experimental import pallas as pl
from jax.experimental.pallas import tpu as pltpu


def _cdiv(a: int, b: int) -> int:
    return -(-a // b)


# ----------------------------------------------------------------------------
# Kernels
# ----------------------------------------------------------------------------
def _make_single_kernel(masked: bool, use_mxu: bool):
    """Whole sequence in one block: write the output directly (no scratch)."""

    if not masked:
        def kernel(x_ref, o_ref):
            o_ref[...] = jnp.sum(
                x_ref[...].astype(jnp.float32), axis=1).astype(o_ref.dtype)
        return kernel

    def kernel(x_ref, m_ref, o_ref):
        x = x_ref[...]
        m = m_ref[...]
        if use_mxu:
            # bf16/f16: batched (1,S)x(S,H) contraction on the MXU, f32 accum.
            acc = jnp.einsum("bqs,bsh->bqh", m[:, None, :], x,
                             preferred_element_type=jnp.float32)[:, 0, :]
        else:
            acc = jnp.sum(
                x.astype(jnp.float32) * m.astype(jnp.float32)[:, :, None],
                axis=1)
        o_ref[...] = acc.astype(o_ref.dtype)

    return kernel


def _make_chunked_kernel(masked: bool, use_mxu: bool, seq_len: int, block_s: int):
    """Sequence chunked on the last grid axis; f32 VMEM accumulator."""
    num_s = _cdiv(seq_len, block_s)
    has_tail = (seq_len % block_s) != 0

    def body(x_ref, m_ref, o_ref, acc_ref):
        k = pl.program_id(2)

        @pl.when(k == 0)
        def _init():
            acc_ref[...] = jnp.zeros_like(acc_ref)

        def accumulate(tail):
            x = x_ref[...]
            m = m_ref[...] if masked else None
            if tail:
                # Edge block along S: out-of-range rows hold unspecified data
                # (possibly NaN) -> zero them with a select, never a multiply.
                valid = seq_len - k * block_s
                x = jnp.where(
                    jax.lax.broadcasted_iota(jnp.int32, x.shape, 1) < valid,
                    x, jnp.zeros_like(x))
                if masked:
                    m = jnp.where(
                        jax.lax.broadcasted_iota(jnp.int32, m.shape, 1) < valid,
                        m, jnp.zeros_like(m))
            if not masked:
                acc_ref[...] += jnp.sum(x.astype(jnp.float32), axis=1)
            elif use_mxu:
                acc_ref[...] += jnp.einsum(
                    "bqs,bsh->bqh", m[:, None, :], x,
                    preferred_element_type=jnp.float32)[:, 0, :]
            else:
                acc_ref[...] += jnp.sum(
                    x.astype(jnp.float32) * m.astype(jnp.float32)[:, :, None],
                    axis=1)

        if has_tail:
            pl.when(k == num_s - 1)(lambda: accumulate(True))
            pl.when(k < num_s - 1)(lambda: accumulate(False))
        else:
            accumulate(False)

        @pl.when(k == num_s - 1)
        def _finalize():
            o_ref[...] = acc_ref[...].astype(o_ref.dtype)

    if masked:
        def kernel(x_ref, m_ref, o_ref, acc_ref):
            body(x_ref, m_ref, o_ref, acc_ref)
    else:
        def kernel(x_ref, o_ref, acc_ref):
            body(x_ref, None, o_ref, acc_ref)
    return kernel


# ----------------------------------------------------------------------------
# Hardware-aware parameters & tiling
# ----------------------------------------------------------------------------
def _hw_params():
    """(x-block byte budget, vmem_limit_bytes, multi_core) for this TPU."""
    vmem_cap = 128 * 1024 * 1024
    try:
        vmem_cap = int(pltpu.get_tpu_info().vmem_capacity_bytes)
    except Exception:
        pass
    if vmem_cap <= 96 * 1024 * 1024:
        # v7x-class: 64 MiB VMEM / TensorCore, 2 TCs, ~3.2 TB/s HBM.  Bigger
        # blocks amortize per-step overhead; leave VMEM headroom for compiler
        # scratch instead of requesting the full physical VMEM.
        block_bytes = 8 * 1024 * 1024
        vmem_limit = min(int(0.7 * vmem_cap), 48 * 1024 * 1024)
        multi_core = True
    else:
        # v5e / v6e: 128 MiB VMEM, single TensorCore.
        block_bytes = 8 * 1024 * 1024
        vmem_limit = 64 * 1024 * 1024
        multi_core = False
    return block_bytes, vmem_limit, multi_core


def _choose_tiles(B, S, H, itemsize, block_bytes, multi_core):
    # dtype-aware sublane granularity: f32 packs 8 rows / vreg, bf16 16, int8 32.
    sub = max(8, 32 // max(1, itemsize))

    def fits(tb, ts, th):
        return tb * ts * th * itemsize <= block_bytes

    # Hidden tile: keep H whole (block dim == full dim is layout-legal for any
    # H) unless even a minimal (sub, min(S,128), H) block blows the budget.
    if H <= 128 or fits(sub, min(S, 128), H):
        TH = H
    else:
        TH = max(128, (block_bytes // (sub * 128 * itemsize)) // 128 * 128)

    # Sequence tile: whole sequence (single pass, no accumulator) if it fits;
    # otherwise chunk in multiples of 128 (keeps the 2-D mask block lane-dense).
    if S <= 128 or fits(sub, S, TH):
        TS = S
    else:
        TS = max(128, (block_bytes // (sub * TH * itemsize)) // 128 * 128)

    # Batch tile: full batch when tiny (block dim == full dim is legal);
    # otherwise grow in vreg-row multiples while the block stays under budget.
    if B <= sub:
        TB = B
    else:
        TB = sub
        while TB * 2 <= B and fits(TB * 2, TS, TH):
            TB *= 2
        if multi_core:
            # Keep >= 2 parallel grid blocks so both TensorCores get work.
            while TB > sub and _cdiv(B, TB) * _cdiv(H, TH) < 2:
                TB //= 2
    return TB, TS, TH


# ----------------------------------------------------------------------------
# Wrapper (forward pass of SumPoolingLayer)
# ----------------------------------------------------------------------------
def sum_pooling_layer(input_batch, attention_mask=None, *, block_bytes=None):
    """Pallas TPU equivalent of SumPoolingLayer.forward.

    Args:
      input_batch: (B, S, H) array.
      attention_mask: optional (B, S) array.
      block_bytes: optional override of the per-block byte budget (test hook).
    Returns:
      (B, H) array: (masked) sum over the sequence axis, in the input dtype.
    """
    B, S, H = input_batch.shape
    dtype = input_batch.dtype
    itemsize = jnp.dtype(dtype).itemsize

    default_block, vmem_limit, multi_core = _hw_params()
    if block_bytes is None:
        block_bytes = default_block

    TB, TS, TH = _choose_tiles(B, S, H, itemsize, block_bytes, multi_core)
    nb, nh = _cdiv(B, TB), _cdiv(H, TH)
    single = TS == S

    masked = attention_mask is not None
    use_mxu = masked and itemsize <= 2 and jnp.issubdtype(dtype, jnp.floating)

    args = [input_batch]
    if masked:
        args.append(attention_mask.astype(dtype))   # keep mask in input dtype

    if single:
        grid = (nb, nh)
        in_specs = [pl.BlockSpec((TB, S, TH), lambda i, j: (i, 0, j))]
        if masked:
            in_specs.append(pl.BlockSpec((TB, S), lambda i, j: (i, 0)))
        out_spec = pl.BlockSpec((TB, TH), lambda i, j: (i, j))
        kernel = _make_single_kernel(masked, use_mxu)
        scratch = []
        semantics = ("parallel", "parallel")
    else:
        ns = _cdiv(S, TS)
        grid = (nb, nh, ns)
        in_specs = [pl.BlockSpec((TB, TS, TH), lambda i, j, k: (i, k, j))]
        if masked:
            in_specs.append(pl.BlockSpec((TB, TS), lambda i, j, k: (i, k)))
        out_spec = pl.BlockSpec((TB, TH), lambda i, j, k: (i, j))
        kernel = _make_chunked_kernel(masked, use_mxu, S, TS)
        scratch = [pltpu.VMEM((TB, TH), jnp.float32)]
        semantics = ("parallel", "parallel", "arbitrary")

    return pl.pallas_call(
        kernel,
        out_shape=jax.ShapeDtypeStruct((B, H), dtype),
        grid_spec=pltpu.PrefetchScalarGridSpec(
            num_scalar_prefetch=0,
            grid=grid,
            in_specs=in_specs,
            out_specs=out_spec,
            scratch_shapes=scratch,
        ),
        compiler_params=pltpu.CompilerParams(
            dimension_semantics=semantics,
            vmem_limit_bytes=vmem_limit,
        ),
    )(*args)


# ----------------------------------------------------------------------------
# Self-test
# ----------------------------------------------------------------------------
if __name__ == "__main__":
    key = jax.random.PRNGKey(0)

    # 1) Small f32 (batch=2, seq=8, hidden=32): single-pass path, masked + not.
    B, S, H = 2, 8, 32
    k1, k2 = jax.random.split(key)
    x = jax.random.normal(k1, (B, S, H), dtype=jnp.float32)
    mask = (jax.random.uniform(k2, (B, S)) > 0.3).astype(jnp.float32)

    out_m = jax.block_until_ready(sum_pooling_layer(x, mask))
    out_u = jax.block_until_ready(sum_pooling_layer(x, None))
    ref_m = jnp.sum(x * mask[..., None], axis=-2)
    ref_u = jnp.sum(x, axis=-2)
    assert out_m.shape == (B, H) and out_u.shape == (B, H)
    assert jnp.allclose(out_m, ref_m, atol=1e-5, rtol=1e-5)
    assert jnp.allclose(out_u, ref_u, atol=1e-5, rtol=1e-5)

    # 2) Unaligned B/S/H with a tiny block budget: forces batch/H tiling and
    #    sequence chunking with the in-kernel tail mask (accumulator path).
    B, S, H = 10, 300, 160
    k3, k4 = jax.random.split(k1)
    x2 = jax.random.normal(k3, (B, S, H), dtype=jnp.float32)
    mask2 = (jax.random.uniform(k4, (B, S)) > 0.5).astype(jnp.float32)
    small = 256 * 1024
    out2_m = jax.block_until_ready(sum_pooling_layer(x2, mask2, block_bytes=small))
    out2_u = jax.block_until_ready(sum_pooling_layer(x2, None, block_bytes=small))
    assert jnp.allclose(out2_m, jnp.sum(x2 * mask2[..., None], axis=-2),
                        atol=1e-4, rtol=1e-4)
    assert jnp.allclose(out2_u, jnp.sum(x2, axis=-2), atol=1e-4, rtol=1e-4)

    # 3) bf16 masked: MXU einsum path, single-pass.
    B, S, H = 8, 64, 128
    k5, k6 = jax.random.split(k3)
    xb = jax.random.normal(k5, (B, S, H), dtype=jnp.bfloat16)
    mb = (jax.random.uniform(k6, (B, S)) > 0.4).astype(jnp.bfloat16)
    refb = jnp.sum(xb.astype(jnp.float32) * mb.astype(jnp.float32)[..., None],
                   axis=-2)
    outb = jax.block_until_ready(sum_pooling_layer(xb, mb)).astype(jnp.float32)
    assert jnp.allclose(outb, refb, atol=0.1, rtol=0.02)

    # 4) bf16 masked, chunked with tail (MXU + accumulator path).
    B, S, H = 8, 200, 128
    k7, k8 = jax.random.split(k5)
    xc = jax.random.normal(k7, (B, S, H), dtype=jnp.bfloat16)
    mc = (jax.random.uniform(k8, (B, S)) > 0.4).astype(jnp.bfloat16)
    refc = jnp.sum(xc.astype(jnp.float32) * mc.astype(jnp.float32)[..., None],
                   axis=-2)
    outc = jax.block_until_ready(
        sum_pooling_layer(xc, mc, block_bytes=128 * 1024)).astype(jnp.float32)
    assert jnp.allclose(outc, refc, atol=0.15, rtol=0.02)

    print("KERNEL_OK")
</pallas_src>

<mosaic_0001>
module attributes {stable_mosaic.version = 11 : i64} {
  func.func @kernel(%arg0: i32, %arg1: i32, %arg2: memref<2x8x32xf32, #tpu.memory_space<vmem>>, %arg3: memref<2x8xf32, #tpu.memory_space<vmem>>, %arg4: memref<2x32xf32, #tpu.memory_space<vmem>>) attributes {dimension_semantics = [#tpu.dimension_semantics<parallel>, #tpu.dimension_semantics<parallel>], iteration_bounds = array<i64: 1, 1>, scalar_prefetch = 0 : i64, scratch_operands = 0 : i64, tpu.core_type = #tpu.core_type<tc>, window_params = [{transform_indices = @transform_0, window_bounds = array<i64: 2, 8, 32>}, {transform_indices = @transform_1, window_bounds = array<i64: 2, 8>}, {transform_indices = @transform_2, window_bounds = array<i64: 2, 32>}]} {
    %c0 = arith.constant 0 : index
    %c0_0 = arith.constant 0 : index
    %c0_1 = arith.constant 0 : index
    %0 = vector.load %arg2[%c0, %c0_0, %c0_1] : memref<2x8x32xf32, #tpu.memory_space<vmem>>, vector<2x8x32xf32>
    %c0_2 = arith.constant 0 : index
    %c0_3 = arith.constant 0 : index
    %1 = vector.load %arg3[%c0_2, %c0_3] : memref<2x8xf32, #tpu.memory_space<vmem>>, vector<2x8xf32>
    %2 = vector.shape_cast %1 : vector<2x8xf32> to vector<2x8x1xf32>
    %3 = vector.broadcast %2 : vector<2x8x1xf32> to vector<2x8x32xf32>
    %4 = arith.mulf %0, %3 : vector<2x8x32xf32>
    %cst = arith.constant dense<0.000000e+00> : vector<2x32xf32>
    %5 = vector.multi_reduction <add>, %4, %cst [1] : vector<2x8x32xf32> to vector<2x32xf32>
    %c0_4 = arith.constant 0 : index
    %c0_5 = arith.constant 0 : index
    %6 = vector.load %arg4[%c0_4, %c0_5] : memref<2x32xf32, #tpu.memory_space<vmem>>, vector<2x32xf32>
    tpu.vector_store %arg4[%c0_4, %c0_5], %5 {strides = array<i32>} : memref<2x32xf32, #tpu.memory_space<vmem>>, vector<2x32xf32>,
    return
  }
  func.func @transform_0(%arg0: i32, %arg1: i32) -> (i32, i32, i32) {
    %c0_i32 = arith.constant 0 : i32
    %c0_i32_0 = arith.constant 0 : i32
    return %arg0, %c0_i32, %arg1 : i32, i32, i32
  }
  func.func @transform_1(%arg0: i32, %arg1: i32) -> (i32, i32) {
    %c0_i32 = arith.constant 0 : i32
    %c0_i32_0 = arith.constant 0 : i32
    return %arg0, %c0_i32 : i32, i32
  }
  func.func @transform_2(%arg0: i32, %arg1: i32) -> (i32, i32) {
    %c0_i32 = arith.constant 0 : i32
    return %arg0, %arg1 : i32, i32
  }
}

</mosaic_0001>

<llo_original>
// kernel: tpu_custom_call.1
$region0: #{tpu_custom_call.1}
  #allocation0 [shape = 'u32[]', space=smem, size = 0x4, offset = 0x4, fixed_abs, tag = 'smem constant byte address 0x4 - core index']
  #allocation1 [shape = 'u32[144,128]{1,0:T(1,128)}', space=vmem, size = 0x12000, scoped, tag = 'internal scratch']
  %s0 = inlined_call_operand.hbm [shape: f32[2,8,32], index: 0, kind: input, shape index: {}]
  %s1 = inlined_call_operand.hbm [shape: f32[2,8], index: 1, kind: input, shape index: {}]
  %s2 = inlined_call_operand.hbm [shape: f32[2,32], index: 2, kind: output, shape index: {}]
  %s3 = sld [smem:[#allocation0]]
  $region26: #{tpu_custom_call.1} parent=0
    _
  %s5 = ssub.s32 1, %s3
  %s6 = scalar_select 0, %s5, %s3
  $region1: #{tpu_custom_call.1} parent=0
    #allocation2 [shape = 'u8[8192]{0}', space=vmem, size = 0x2000, scoped, tag = 'input window, operand 0, single buffered']
    #allocation3 [shape = 's32[1]{0}', space=sflag, size = 0x4, scoped, tag = 'scoped memory for tpu_custom_call.1']
    #allocation4 [shape = 's32[1]{0}', space=sflag, size = 0x4, scoped, tag = 'scoped memory for tpu_custom_call.1']
    #allocation5 [shape = 'u8[1024]{0}', space=vmem, size = 0x400, scoped, tag = 'input window, operand 1, single buffered']
    #allocation6 [shape = 's32[1]{0}', space=sflag, size = 0x4, scoped, tag = 'scoped memory for tpu_custom_call.1']
    #allocation7 [shape = 'u8[1024]{0}', space=vmem, size = 0x400, scoped, tag = 'output window, operand 0, single buffered']
    %7 = vsyncpa [#allocation3], 0
    %8 = vsyncpa [#allocation6], 0
    %9 = vsyncpa [#allocation4], 0
    // Predicated region
    $region2: #{tpu_custom_call.1} parent=1 // pred_check
      _
    $region3: #{tpu_custom_call.1} parent=1 // pred_check_branch
      %11 = sbr.rel (0) target = $region5
    $region4: #{tpu_custom_call.1} parent=1 // pred_region
      %s13 = ssub.s32 256, 256
      %14 = vsyncadd [#allocation3], %s13
      %s15 = sshll.u32 [#allocation2], 4
      %s16 = int_to_ptr.vmem [resolvable:$true] %s15
      %21 = dma.hbm_to_vmem [thread:$0]  %s0, 256, %s16, [#allocation3], 128, 128, 8
    $region5: #{tpu_custom_call.1} parent=1 // pred_fallthru
      _
    // Predicated region
    $region6: #{tpu_custom_call.1} parent=1 // pred_check
      _
    $region7: #{tpu_custom_call.1} parent=1 // pred_check_branch
      %23 = sbr.rel (0) target = $region9
    $region8: #{tpu_custom_call.1} parent=1 // pred_region
      %s25 = ssub.s32 32, 32
      %26 = vsyncadd [#allocation6], %s25
      %s28 = sshll.u32 [#allocation5], 4
      %s29 = int_to_ptr.vmem [resolvable:$true] %s28
      %31 = dma.hbm_to_vmem [thread:$0]  %s1, 32, %s29, [#allocation6]
    $region9: #{tpu_custom_call.1} parent=1 // pred_fallthru
      _
    // Predicated region
    $region10: #{tpu_custom_call.1} parent=1 // pred_check
      _
    $region11: #{tpu_custom_call.1} parent=1 // pred_check_branch
      %33 = sbr.rel (0) target = $region13
    $region12: #{tpu_custom_call.1} parent=1 // pred_region
      %34 = dma.done [#allocation3], 256
    $region13: #{tpu_custom_call.1} parent=1 // pred_fallthru
      _
    // Predicated region
    $region14: #{tpu_custom_call.1} parent=1 // pred_check
      _
    $region15: #{tpu_custom_call.1} parent=1 // pred_check_branch
      %36 = sbr.rel (0) target = $region17
    $region16: #{tpu_custom_call.1} parent=1 // pred_region
      %37 = dma.done [#allocation6], 32
    $region17: #{tpu_custom_call.1} parent=1 // pred_fallthru
      _
    %v38 = vld [vmem:[#allocation2] sm:$0xff]
    %v39 = vld [vmem:[#allocation2 + $0x8] sm:$0xff]
    %v40 = vld [vmem:[#allocation5] sm:$0x3]
    %v41 = vlaneseq
    %v42 = vshrl.u32 %v41, 7
    %v43 = vsub.s32 0, %v42
    %v44 = vrot.slane %v40, %v43
    %46 = vbcast.lane.b32.xlu0 %v44, 256
    %v47 = vpop.permute.xlu0 %46
    %v48 = vlaneseq
    %v49 = vshrl.u32 %v48, 7
    %v50 = vsub.s32 1, %v49
    %v51 = vrot.slane %v40, %v50
    %53 = vbcast.lane.b32.xlu0 %v51, 256
    %v54 = vpop.permute.xlu0 %53
    %v55 = vmul.f32 %v38, %v47
    %v56 = vmul.f32 %v39, %v54
    %vm57 = vcmask 261120
    %v58 = vsel %vm57, %v55, 0.0
    %v59 = vrot.slane %v58, 4
    %v60 = vadd.f32 %v58, %v59
    %v61 = vrot.slane %v60, 2
    %v62 = vadd.f32 %v60, %v61
    %v63 = vrot.slane %v62, 1
    %v64 = vadd.f32 %v62, %v63
    %v65 = vsel %vm57, %v56, 0.0
    %v66 = vrot.slane %v65, 4
    %v67 = vadd.f32 %v65, %v66
    %v68 = vrot.slane %v67, 2
    %v69 = vadd.f32 %v67, %v68
    %v70 = vrot.slane %v69, 1
    %v71 = vadd.f32 %v69, %v70
    %vm74 = vcmask 1041409
    %v75 = vsel %vm74, %v71, %v64
    %vm77 = vcmask 254976
    %78 = vst.msk [vmem:[#allocation7] sm:$0x3] %vm77, %v75
    // Predicated region
    $region18: #{tpu_custom_call.1} parent=1 // pred_check
      _
    $region19: #{tpu_custom_call.1} parent=1 // pred_check_branch
      %80 = sbr.rel (0) target = $region21
    $region20: #{tpu_custom_call.1} parent=1 // pred_region
      %s82 = ssub.s32 32, 32
      %83 = vsyncadd [#allocation4], %s82
      %s85 = sshll.u32 [#allocation7], 4
      %s86 = int_to_ptr.vmem [resolvable:$true] %s85
      %88 = dma.vmem_to_hbm [thread:$0]  %s86, 32, %s2, [#allocation4]
    $region21: #{tpu_custom_call.1} parent=1 // pred_fallthru
      _
    // Predicated region
    $region22: #{tpu_custom_call.1} parent=1 // pred_check
      _
    $region23: #{tpu_custom_call.1} parent=1 // pred_check_branch
      %90 = sbr.rel (0) target = $region25
    $region24: #{tpu_custom_call.1} parent=1 // pred_region
      %91 = dma.done [#allocation4], 32
    $region25: #{tpu_custom_call.1} parent=1 // pred_fallthru
      _
    %92 = vsyncpa [#allocation3], 1
    %93 = vsyncpa [#allocation6], 1
    %94 = vsyncpa [#allocation4], 1

</llo_original>
